<compile_context>
chip_gen: v5e
topology: v5e:2x2
jax: 0.10.0
libtpu: 0.0.40
codegen_flags: <defaults>
</compile_context>

<pallas_src>
import math

import jax
import jax.numpy as jnp
from jax.experimental import pallas as pl
from jax.experimental.pallas import tpu as pltpu


def _cdiv(a, b):
    return -(-a // b)


def _learnable_sigmoid_kernel(x_ref, slope_ref, beta_ref, o_ref):
    # x_ref:     (tile_rows, tile_lanes) VMEM tile of the lane-dense input view
    # slope_ref: (1, tile_lanes)         broadcast parameter row (resident per lane tile)
    # beta_ref:  (1,)                    scalar beta in SMEM
    x = x_ref[...]
    s = slope_ref[...]
    z = (s * x).astype(jnp.float32)                 # VPU multiply (f32: safe on v5e too)
    beta = beta_ref[0]
    # sigmoid(z) = 0.5 * (1 + tanh(z / 2)) -> single EUP transcendental per element
    y = beta * (0.5 + 0.5 * jnp.tanh(0.5 * z))
    o_ref[...] = y.astype(o_ref.dtype)


def _choose_reps(total_rows, in_features):
    """Pick reps (a divisor of total_rows) so L = in_features*reps is lane-friendly."""
    q = 128 // math.gcd(in_features, 128)       # smallest reps with F*reps % 128 == 0
    if total_rows % q == 0:
        return q                                # L = lcm(F, 128): fully lane-dense
    # No divisor of total_rows gives a multiple of 128; widen lanes as much as is
    # reasonable so most 128-lane groups per row are still full (only tail masked).
    lane_cap = max(in_features, 1024)
    best = 1
    d = 1
    while d * d <= total_rows:
        if total_rows % d == 0:
            for c in (d, total_rows // d):
                if in_features * c <= lane_cap and c > best:
                    best = c
        d += 1
    return best


def learnable_sigmoid(x, slope, beta=1.0, *,
                      target_block_bytes=4 << 20,
                      vmem_limit_bytes=48 * 1024 * 1024):
    """y = beta * sigmoid(slope * x); slope (in_features,) broadcasts over x's last dim."""
    orig_shape = x.shape
    F = slope.shape[0]
    assert orig_shape[-1] == F, "last dim of x must equal in_features"

    n_elems = x.size
    itemsize = jnp.dtype(x.dtype).itemsize
    sub = max(8, 32 // itemsize)                    # sublane granule: 8 f32, 16 bf16, 32 i8/fp8
    total_bytes = n_elems * itemsize

    # --- lane-dense repack ----------------------------------------------------
    total_rows = n_elems // F
    reps = _choose_reps(total_rows, F)
    L = F * reps
    rows = n_elems // L

    x2 = x.reshape(rows, L)                         # contiguous reshape: no HBM copy
    slope_row = jnp.tile(slope, reps).reshape(1, L)
    beta_arr = jnp.asarray([beta], dtype=jnp.float32)

    # --- tile sizing ----------------------------------------------------------
    row_bytes = L * itemsize
    if L % 128 == 0 and sub * row_bytes > target_block_bytes:
        # Very wide feature rows: tile the lane dimension too (2D grid), keeping
        # the double-buffered footprint bounded instead of overshooting VMEM.
        tile_lanes = max(128, ((target_block_bytes // (sub * itemsize)) // 128) * 128)
        tile_lanes = min(tile_lanes, L)
        tile_rows = min(sub, rows)
    else:
        tile_lanes = L
        tile_rows = max(sub, (target_block_bytes // row_bytes) // sub * sub)
        tile_rows = min(tile_rows, rows)

    # Megacore guard (v7x: 2 TCs): guarantee >= 2 grid steps for non-tiny arrays.
    n_row_tiles = _cdiv(rows, tile_rows)
    n_lane_tiles = _cdiv(L, tile_lanes)
    if total_bytes > (1 << 20) and n_row_tiles * n_lane_tiles < 2 and rows > sub:
        half = ((_cdiv(rows, 2) + sub - 1) // sub) * sub
        if half < rows:
            tile_rows = half
            n_row_tiles = _cdiv(rows, tile_rows)

    grid = (n_row_tiles, n_lane_tiles)              # ragged tails masked by Pallas

    cost = pl.CostEstimate(
        flops=5 * n_elems,
        transcendentals=n_elems,
        bytes_accessed=2 * n_elems * itemsize + L * jnp.dtype(slope_row.dtype).itemsize,
    )

    out = pl.pallas_call(
        _learnable_sigmoid_kernel,
        out_shape=jax.ShapeDtypeStruct((rows, L), x.dtype),
        grid_spec=pltpu.PrefetchScalarGridSpec(
            num_scalar_prefetch=0,
            grid=grid,
            in_specs=[
                pl.BlockSpec((tile_rows, tile_lanes), lambda i, j: (i, j)),
                pl.BlockSpec((1, tile_lanes), lambda i, j: (0, j)),  # parameter row
                pl.BlockSpec(memory_space=pltpu.SMEM),               # scalar beta
            ],
            out_specs=pl.BlockSpec((tile_rows, tile_lanes), lambda i, j: (i, j)),
        ),
        compiler_params=pltpu.CompilerParams(
            dimension_semantics=("parallel", "parallel"),
            vmem_limit_bytes=vmem_limit_bytes,
        ),
        cost_estimate=cost,
    )(x2, slope_row, beta_arr)

    return out.reshape(orig_shape)


if __name__ == "__main__":
    key = jax.random.PRNGKey(0)
    B, T, F = 2, 8, 32                  # in_features = 32
    x = jax.random.normal(key, (B, T, F), dtype=jnp.float32)

    # nn.Parameter(torch.ones(in_features)) equivalent
    slope = jnp.ones((F,), dtype=jnp.float32)
    beta = 1.0

    y = learnable_sigmoid(x, slope, beta)
    y = jax.block_until_ready(y)

    # Reference check (plain JAX). tanh-based sigmoid is exact to f32 roundoff.
    y_ref = beta * jax.nn.sigmoid(slope * x)
    assert jnp.max(jnp.abs(y - y_ref)) < 1e-5, "mismatch vs reference"

    print("KERNEL_OK")
</pallas_src>

<mosaic_0001>
module attributes {stable_mosaic.version = 11 : i64} {
  func.func @_learnable_sigmoid_kernel(%arg0: i32, %arg1: i32, %arg2: memref<4x128xf32, #tpu.memory_space<vmem>>, %arg3: memref<1x128xf32, #tpu.memory_space<vmem>>, %arg4: memref<1xf32, #tpu.memory_space<smem>>, %arg5: memref<4x128xf32, #tpu.memory_space<vmem>>) attributes {dimension_semantics = [#tpu.dimension_semantics<parallel>, #tpu.dimension_semantics<parallel>], iteration_bounds = array<i64: 1, 1>, scalar_prefetch = 0 : i64, scratch_operands = 0 : i64, tpu.core_type = #tpu.core_type<tc>, window_params = [{transform_indices = @transform_0, window_bounds = array<i64: 4, 128>}, {transform_indices = @transform_1, window_bounds = array<i64: 1, 128>}, {transform_indices = @transform_2, window_bounds = array<i64: 1>}, {transform_indices = @transform_3, window_bounds = array<i64: 4, 128>}]} {
    %c0 = arith.constant 0 : index
    %c0_0 = arith.constant 0 : index
    %0 = vector.load %arg2[%c0, %c0_0] : memref<4x128xf32, #tpu.memory_space<vmem>>, vector<4x128xf32>
    %c0_1 = arith.constant 0 : index
    %c0_2 = arith.constant 0 : index
    %1 = vector.load %arg3[%c0_1, %c0_2] : memref<1x128xf32, #tpu.memory_space<vmem>>, vector<1x128xf32>
    %2 = vector.broadcast %1 : vector<1x128xf32> to vector<4x128xf32>
    %3 = arith.mulf %2, %0 : vector<4x128xf32>
    %c0_3 = arith.constant 0 : index
    %4 = memref.load %arg4[%c0_3] : memref<1xf32, #tpu.memory_space<smem>>
    %cst = arith.constant 5.000000e-01 : f32
    %5 = vector.broadcast %cst : f32 to vector<4x128xf32>
    %6 = arith.mulf %5, %3 : vector<4x128xf32>
    %7 = math.tanh %6 : vector<4x128xf32>
    %cst_4 = arith.constant 5.000000e-01 : f32
    %8 = vector.broadcast %cst_4 : f32 to vector<4x128xf32>
    %9 = arith.mulf %8, %7 : vector<4x128xf32>
    %cst_5 = arith.constant 5.000000e-01 : f32
    %10 = vector.broadcast %cst_5 : f32 to vector<4x128xf32>
    %11 = arith.addf %10, %9 : vector<4x128xf32>
    %12 = vector.broadcast %4 : f32 to vector<4x128xf32>
    %13 = arith.mulf %12, %11 : vector<4x128xf32>
    %c0_6 = arith.constant 0 : index
    %c0_7 = arith.constant 0 : index
    %14 = vector.load %arg5[%c0_6, %c0_7] : memref<4x128xf32, #tpu.memory_space<vmem>>, vector<4x128xf32>
    tpu.vector_store %arg5[%c0_6, %c0_7], %13 {strides = array<i32>} : memref<4x128xf32, #tpu.memory_space<vmem>>, vector<4x128xf32>,
    return
  }
  func.func @transform_0(%arg0: i32, %arg1: i32) -> (i32, i32) {
    %c0_i32 = arith.constant 0 : i32
    return %arg0, %arg1 : i32, i32
  }
  func.func @transform_1(%arg0: i32, %arg1: i32) -> (i32, i32) {
    %c0_i32 = arith.constant 0 : i32
    %c0_i32_0 = arith.constant 0 : i32
    return %c0_i32, %arg1 : i32, i32
  }
  func.func @transform_2(%arg0: i32, %arg1: i32) -> i32 {
    %c0_i32 = arith.constant 0 : i32
    %c0_i32_0 = arith.constant 0 : i32
    return %c0_i32 : i32
  }
  func.func @transform_3(%arg0: i32, %arg1: i32) -> (i32, i32) {
    %c0_i32 = arith.constant 0 : i32
    return %arg0, %arg1 : i32, i32
  }
}

</mosaic_0001>

<llo_original>
// kernel: tpu_custom_call.1
$region0: #{tpu_custom_call.1}
  #allocation0 [shape = 'u32[]', space=smem, size = 0x4, offset = 0x4, fixed_abs, tag = 'smem constant byte address 0x4 - core index']
  #allocation1 [shape = 'u32[72,128]{1,0:T(1,128)}', space=vmem, size = 0x9000, scoped, tag = 'internal scratch']
  #allocation2 [shape = 'f32[1]{0:T(128)S(6)}', space=smem, size = 0x200, scoped, tag = 'scoped memory for tpu_custom_call.1']
  %s0 = inlined_call_operand.hbm [shape: f32[4,128], index: 0, kind: input, shape index: {}]
  %s1 = inlined_call_operand.vmem [shape: f32[1,128], index: 1, kind: input, shape index: {}]
  %s2 = inlined_call_operand.<no memory space> [shape: f32[1], index: 2, kind: input, shape index: {}]
  %s3 = inlined_call_operand.hbm [shape: f32[4,128], index: 3, kind: output, shape index: {}]
  %s4 = sld [smem:[#allocation0]]
  $region26: #{tpu_custom_call.1} parent=0
    _
  %s6 = ssub.s32 1, %s4
  %s7 = scalar_select 0, %s6, %s4
  %8 = sst [smem:[#allocation2]] %s2
  $region1: #{tpu_custom_call.1} parent=0
    #allocation3 [shape = 'u8[2048]{0}', space=vmem, size = 0x800, scoped, tag = 'input window, operand 0, single buffered']
    #allocation4 [shape = 's32[1]{0}', space=sflag, size = 0x4, scoped, tag = 'scoped memory for tpu_custom_call.1']
    #allocation5 [shape = 's32[1]{0}', space=sflag, size = 0x4, scoped, tag = 'scoped memory for tpu_custom_call.1']
    #allocation6 [shape = 'u8[2048]{0}', space=vmem, size = 0x800, scoped, tag = 'output window, operand 0, single buffered']
    %9 = vsyncpa [#allocation4], 0
    %10 = vsyncpa [#allocation5], 0
    // Predicated region
    $region2: #{tpu_custom_call.1} parent=1 // pred_check
      _
    $region3: #{tpu_custom_call.1} parent=1 // pred_check_branch
      %12 = sbr.rel (0) target = $region5
    $region4: #{tpu_custom_call.1} parent=1 // pred_region
      %14 = vsyncadd [#allocation4], 0
      %s16 = sshll.u32 %s0, 4
      %s17 = int_to_ptr.hbm [resolvable:$true] %s16
      %s18 = sshll.u32 [#allocation3], 4
      %s19 = int_to_ptr.vmem [resolvable:$true] %s18
      %21 = dma.hbm_to_vmem [thread:$0]  %s17, 64, %s19, [#allocation4]
    $region5: #{tpu_custom_call.1} parent=1 // pred_fallthru
      _
    // Predicated region
    $region6: #{tpu_custom_call.1} parent=1 // pred_check
      _
    $region7: #{tpu_custom_call.1} parent=1 // pred_check_branch
      %23 = sbr.rel (0) target = $region9
    $region8: #{tpu_custom_call.1} parent=1 // pred_region
      _
    $region9: #{tpu_custom_call.1} parent=1 // pred_fallthru
      _
    // Predicated region
    $region10: #{tpu_custom_call.1} parent=1 // pred_check
      _
    $region11: #{tpu_custom_call.1} parent=1 // pred_check_branch
      %25 = sbr.rel (0) target = $region13
    $region12: #{tpu_custom_call.1} parent=1 // pred_region
      _
    $region13: #{tpu_custom_call.1} parent=1 // pred_fallthru
      _
    // Predicated region
    $region14: #{tpu_custom_call.1} parent=1 // pred_check
      _
    $region15: #{tpu_custom_call.1} parent=1 // pred_check_branch
      %27 = sbr.rel (0) target = $region17
    $region16: #{tpu_custom_call.1} parent=1 // pred_region
      %29 = dma.done [#allocation4], 64
    $region17: #{tpu_custom_call.1} parent=1 // pred_fallthru
      _
    %v30 = vld [vmem:[#allocation3] sm:$0xf]
    %v31 = vld [vmem:[%s1] sm:$0x1]
    %v33 = vperm.slane %v31, 0
    %v35 = vmul.f32 %v33, %v30
    %s36 = sld [smem:[#allocation2]]
    %v37 = vmul.f32 %v35, 0.5
    %v38 = vtanh.pop %v37
    %v39 = vmul.f32 %v38, 0.5
    %v40 = vadd.f32 %v39, 0.5
    %v41 = vstv %s36
    %v42 = vmul.f32 %v41, %v40
    %43 = vst [vmem:[#allocation6] sm:$0xf] %v42
    // Predicated region
    $region18: #{tpu_custom_call.1} parent=1 // pred_check
      _
    $region19: #{tpu_custom_call.1} parent=1 // pred_check_branch
      %45 = sbr.rel (0) target = $region21
    $region20: #{tpu_custom_call.1} parent=1 // pred_region
      %47 = vsyncadd [#allocation5], 0
      %s49 = sshll.u32 [#allocation6], 4
      %s50 = int_to_ptr.vmem [resolvable:$true] %s49
      %s51 = sshll.u32 %s3, 4
      %s52 = int_to_ptr.hbm [resolvable:$true] %s51
      %54 = dma.vmem_to_hbm [thread:$0]  %s50, 64, %s52, [#allocation5]
    $region21: #{tpu_custom_call.1} parent=1 // pred_fallthru
      _
    // Predicated region
    $region22: #{tpu_custom_call.1} parent=1 // pred_check
      _
    $region23: #{tpu_custom_call.1} parent=1 // pred_check_branch
      %56 = sbr.rel (0) target = $region25
    $region24: #{tpu_custom_call.1} parent=1 // pred_region
      %58 = dma.done [#allocation5], 64
    $region25: #{tpu_custom_call.1} parent=1 // pred_fallthru
      _
    %59 = vsyncpa [#allocation4], 1
    %60 = vsyncpa [#allocation5], 1

</llo_original>
